<compile_context>
chip_gen: v5e
topology: v5e:2x2
jax: 0.10.0
libtpu: 0.0.40
codegen_flags: <defaults>
</compile_context>

<pallas_src>
import jax
import jax.numpy as jnp
from jax.experimental import pallas as pl
from jax.experimental.pallas import tpu as pltpu

HIDDEN_DIM = 32          # MeshGraphMLP hidden_dim
OUT_DIM = 32             # MeshGraphMLP output_dim
LN_EPS = 1e-5
LANES = 128
ROW_PACK = LANES // OUT_DIM      # 4 logical rows packed per 128-lane row


def _round_up(x, m):
    return ((x + m - 1) // m) * m


# ----------------------------------------------------------------------------
# Kernel: one row-tile of the fused (row-packed) MLP + LayerNorm.
# ----------------------------------------------------------------------------
def _fused_mlp_ln_kernel(gid_ref, x_ref, w1_ref, b1_ref, w2_ref, b2_ref,
                         gamma_ref, beta_ref, gmean_ref, o_ref):
    del gid_ref  # only consumed by the index_maps (per-tile weight selection)

    x = x_ref[...]                                   # (T/4, 4*in_pad), matmul dtype

    # Linear 1 (block-diagonal => 4 logical rows at once) + SiLU.
    # MXU operands stay in the matmul dtype (bf16 by default); accumulate f32.
    h = jnp.dot(x, w1_ref[...], preferred_element_type=jnp.float32) + b1_ref[...]
    h = h * jax.nn.sigmoid(h)                        # f32 elementwise (VPU + EUP)

    # Linear 2 (block-diagonal), K = N = 128 on the MXU.
    y = jnp.dot(h.astype(w2_ref.dtype), w2_ref[...],
                preferred_element_type=jnp.float32) + b2_ref[...]

    # Segmented LayerNorm over each 32-lane group via group-averaging matmuls.
    # mean and E[y^2] both depend only on y (var = E[y^2] - mean^2), so the two
    # reduction matmuls are independent and can be issued back-to-back.
    ym = y.astype(gmean_ref.dtype)
    ysq = (y * y).astype(gmean_ref.dtype)            # square in f32, then round
    mean = jnp.dot(ym, gmean_ref[...], preferred_element_type=jnp.float32)
    meansq = jnp.dot(ysq, gmean_ref[...], preferred_element_type=jnp.float32)
    var = jnp.maximum(meansq - mean * mean, 0.0)     # clamp: bf16 cancellation guard

    out = (y - mean) * jax.lax.rsqrt(var + LN_EPS) * gamma_ref[...] + beta_ref[...]
    o_ref[...] = out.astype(o_ref.dtype)             # (T/4, 128), unmasked stores


# ----------------------------------------------------------------------------
# Parameter packing: block-diagonal / lane-dense weights per MLP group.
# ----------------------------------------------------------------------------
def _pack_group_params(param_list, in_pad, matmul_dtype=jnp.bfloat16):
    eye = jnp.eye(ROW_PACK, dtype=jnp.float32)
    w1b, b1t, w2b, b2t, gt, bt = [], [], [], [], [], []
    for (w1, b1, w2, b2, gamma, beta) in param_list:
        in_dim = w1.shape[0]
        w1p = jnp.zeros((in_pad, HIDDEN_DIM), jnp.float32)
        w1p = w1p.at[:in_dim, :].set(w1.astype(jnp.float32))
        w1b.append(jnp.kron(eye, w1p).astype(matmul_dtype))          # (4*in_pad,128)
        w2b.append(jnp.kron(eye, w2.astype(jnp.float32)).astype(matmul_dtype))
        # Biases / LN affine stay f32 (elementwise path is f32 anyway).
        b1t.append(jnp.tile(b1.astype(jnp.float32).reshape(1, -1), (1, ROW_PACK)))
        b2t.append(jnp.tile(b2.astype(jnp.float32).reshape(1, -1), (1, ROW_PACK)))
        gt.append(jnp.tile(gamma.astype(jnp.float32).reshape(1, -1), (1, ROW_PACK)))
        bt.append(jnp.tile(beta.astype(jnp.float32).reshape(1, -1), (1, ROW_PACK)))
    return (jnp.stack(w1b), jnp.stack(b1t), jnp.stack(w2b), jnp.stack(b2t),
            jnp.stack(gt), jnp.stack(bt))


# ----------------------------------------------------------------------------
# Fused wrapper: all four MLPs in a single pallas_call.
# ----------------------------------------------------------------------------
def fused_mesh_graph_mlps(xs, packed_params, *, tile_rows=32768, out_dtype=None,
                          vmem_budget_bytes=24 << 20):
    """Run every MeshGraphMLP (one per entry of `xs`) in one fused Pallas call.

    xs            : list of [rows_g, in_dim_g] arrays (one per group).
    packed_params : output of _pack_group_params (stacked per group).
    Returns       : list of [rows_g, OUT_DIM] arrays.
    """
    w1b, b1t, w2b, b2t, gt, bt = packed_params
    matmul_dtype = w1b.dtype                        # bf16 by default
    in_pad = w1b.shape[1] // ROW_PACK
    out_dtype = out_dtype or xs[0].dtype

    x_isz = jnp.dtype(matmul_dtype).itemsize
    o_isz = jnp.dtype(out_dtype).itemsize
    row_bytes = ROW_PACK * in_pad * x_isz + LANES * o_isz   # per packed row (x+out)

    # Row tile: as large as possible (amortize ~0.35us per grid step), capped so
    # the double-buffered x+out blocks stay inside a v7x-safe VMEM budget.
    # Rounded to 16*ROW_PACK = 64 rows so tile_p is bf16 (16,128)-tiling safe.
    max_rows = max(x.shape[0] for x in xs)
    tile_cap = max((vmem_budget_bytes // (2 * row_bytes)) * ROW_PACK,
                   16 * ROW_PACK)
    tile = _round_up(min(tile_rows, max_rows, tile_cap), 16 * ROW_PACK)
    tile_p = tile // ROW_PACK

    # Pad (rows -> multiple of tile, features -> in_pad), cast to the matmul
    # dtype, pack 4 logical rows per 128-lane row, and concat all groups.
    # Under jit this is a single fused pad/cast/concat pass over the inputs.
    # NOTE: for GraphCast steady-state, the m2m node / edge groups are static
    # across steps and their packed form can be cached by the caller.
    packed_x, gids, rows_padded = [], [], []
    for g, x in enumerate(xs):
        rows, in_dim = x.shape
        rows_p = _round_up(rows, tile)
        xp = jnp.pad(x.astype(matmul_dtype),
                     ((0, rows_p - rows), (0, in_pad - in_dim)))
        packed_x.append(xp.reshape(rows_p // ROW_PACK, ROW_PACK * in_pad))
        gids.extend([g] * (rows_p // tile))
        rows_padded.append(rows_p)
    x_packed = jnp.concatenate(packed_x, axis=0)
    n_packed = x_packed.shape[0]
    gid = jnp.asarray(gids, jnp.int32)
    num_tiles = int(gid.shape[0])

    # Group-averaging matrix for the segmented LayerNorm (1/32 is exact in bf16).
    gmean = jnp.kron(jnp.eye(ROW_PACK, dtype=jnp.float32),
                     jnp.full((OUT_DIM, OUT_DIM), 1.0 / OUT_DIM, jnp.float32)
                     ).astype(matmul_dtype)

    group_spec = lambda i, g_ref: (g_ref[i], 0, 0)   # per-tile weight select (P2)

    # Advisory cost so XLA schedules the surrounding pad/concat/slice sensibly.
    n_groups = w1b.shape[0]
    param_bytes = int((w1b.size + w2b.size) // n_groups * x_isz
                      + (b1t.size + b2t.size + gt.size + bt.size) // n_groups * 4
                      + gmean.size * x_isz)
    cost = pl.CostEstimate(
        flops=int(n_packed * 2 * LANES * (ROW_PACK * in_pad + 3 * LANES)),
        transcendentals=int(n_packed * LANES),
        bytes_accessed=int(n_packed * row_bytes + num_tiles * param_bytes))

    # Enough scoped VMEM for double-buffered x+out blocks (+weights/headroom),
    # capped well under v7x's 64 MiB per TensorCore.
    vmem_limit = int(min(max(2 * tile_p * row_bytes + (4 << 20), 32 << 20),
                         48 << 20))

    out_packed = pl.pallas_call(
        _fused_mlp_ln_kernel,
        out_shape=jax.ShapeDtypeStruct((n_packed, LANES), out_dtype),
        grid_spec=pltpu.PrefetchScalarGridSpec(
            num_scalar_prefetch=1,
            grid=(num_tiles,),
            in_specs=[
                pl.BlockSpec((tile_p, ROW_PACK * in_pad),
                             lambda i, g_ref: (i, 0)),                  # x row tile
                pl.BlockSpec((None, ROW_PACK * in_pad, LANES), group_spec),  # W1 blk
                pl.BlockSpec((None, 1, LANES), group_spec),             # b1 (tiled)
                pl.BlockSpec((None, LANES, LANES), group_spec),         # W2 blk
                pl.BlockSpec((None, 1, LANES), group_spec),             # b2 (tiled)
                pl.BlockSpec((None, 1, LANES), group_spec),             # LN gamma
                pl.BlockSpec((None, 1, LANES), group_spec),             # LN beta
                pl.BlockSpec((LANES, LANES), lambda i, g_ref: (0, 0)),  # gmean
            ],
            out_specs=pl.BlockSpec((tile_p, LANES), lambda i, g_ref: (i, 0)),
        ),
        compiler_params=pltpu.CompilerParams(
            dimension_semantics=("parallel",),   # shard row tiles across TCs (v7x)
            vmem_limit_bytes=vmem_limit),
        cost_estimate=cost,
    )(gid, x_packed, w1b, b1t, w2b, b2t, gt, bt, gmean)

    # Unpack lane-dense output back to [N, 32] (pure row-major view) and slice.
    out_all = out_packed.reshape(n_packed * ROW_PACK, OUT_DIM)
    outs, off = [], 0
    for x, rows_p in zip(xs, rows_padded):
        outs.append(out_all[off:off + x.shape[0]])
        off += rows_p
    return outs


# ----------------------------------------------------------------------------
# Parameter init (synthetic, torch-Linear-equivalent; weights stored (in,out)).
# ----------------------------------------------------------------------------
def init_mlp_params(key, in_dim, hidden_dim=HIDDEN_DIM, out_dim=OUT_DIM,
                    dtype=jnp.float32):
    k1, k2, k3, k4 = jax.random.split(key, 4)
    s1 = 1.0 / jnp.sqrt(jnp.float32(in_dim))
    s2 = 1.0 / jnp.sqrt(jnp.float32(hidden_dim))
    w1 = (jax.random.normal(k1, (in_dim, hidden_dim)) * s1).astype(dtype)
    b1 = (jax.random.normal(k2, (1, hidden_dim)) * s1).astype(dtype)
    w2 = (jax.random.normal(k3, (hidden_dim, out_dim)) * s2).astype(dtype)
    b2 = (jax.random.normal(k4, (1, out_dim)) * s2).astype(dtype)
    gamma = jnp.ones((1, out_dim), dtype)
    beta = jnp.zeros((1, out_dim), dtype)
    return (w1, b1, w2, b2, gamma, beta)


def mesh_graph_mlp_ref(x, params, matmul_dtype=jnp.float32):
    """Pure-JAX reference of one MeshGraphMLP (matmul operands in matmul_dtype,
    f32 accumulation/elementwise, like the kernel) for correctness checking."""
    w1, b1, w2, b2, gamma, beta = params
    md = matmul_dtype
    h = jnp.dot(x.astype(md), w1.astype(md),
                preferred_element_type=jnp.float32) + b1.astype(jnp.float32)
    h = h * jax.nn.sigmoid(h)
    y = jnp.dot(h.astype(md), w2.astype(md),
                preferred_element_type=jnp.float32) + b2.astype(jnp.float32)
    mean = jnp.mean(y, axis=-1, keepdims=True)
    var = jnp.mean((y - mean) ** 2, axis=-1, keepdims=True)
    return ((y - mean) * jax.lax.rsqrt(var + LN_EPS)) * gamma.astype(jnp.float32) \
        + beta.astype(jnp.float32)


class GraphCastEncoderEmbedderPallas:
    """Feature embedder: grid nodes, m2m nodes, g2m edges, m2m edges."""

    def __init__(self, input_channels, key, matmul_dtype=jnp.bfloat16):
        kg, kn, kge, kme = jax.random.split(key, 4)
        self.in_dims = (input_channels, 3, 4, 4)
        self.params = [
            init_mlp_params(kg, input_channels),
            init_mlp_params(kn, 3),
            init_mlp_params(kge, 4),
            init_mlp_params(kme, 4),
        ]
        self.matmul_dtype = matmul_dtype
        # Common padded in_dim; multiple of 4 so 4*in_pad is (16,128)-tiling safe.
        self.in_pad = _round_up(max(self.in_dims), 4)
        self.packed = _pack_group_params(self.params, self.in_pad, matmul_dtype)

    def __call__(self, grid_input, m2m_node_input, g2m_edge_input,
                 m2m_edge_input, *, tile_rows=32768, out_dtype=None):
        outs = fused_mesh_graph_mlps(
            [grid_input, m2m_node_input, g2m_edge_input, m2m_edge_input],
            self.packed, tile_rows=tile_rows, out_dtype=out_dtype)
        return tuple(outs)


if __name__ == "__main__":
    key = jax.random.PRNGKey(0)
    k_params, kx1, kx2, kx3, kx4 = jax.random.split(key, 5)

    input_channels = 8
    n_grid, n_mesh, e_g2m, e_m2m = 64, 32, 72, 64   # ragged counts on purpose

    grid_input = jax.random.normal(kx1, (n_grid, input_channels), jnp.float32)
    m2m_node_input = jax.random.normal(kx2, (n_mesh, 3), jnp.float32)
    g2m_edge_input = jax.random.normal(kx3, (e_g2m, 4), jnp.float32)
    m2m_edge_input = jax.random.normal(kx4, (e_m2m, 4), jnp.float32)
    inputs = (grid_input, m2m_node_input, g2m_edge_input, m2m_edge_input)

    # Default (fast) path: bf16 MXU operands, f32 elementwise math, f32 output.
    embedder = GraphCastEncoderEmbedderPallas(input_channels, k_params,
                                              matmul_dtype=jnp.bfloat16)
    fwd = jax.jit(embedder.__call__)
    outs = jax.block_until_ready(fwd(*inputs))

    # Correctness vs a bf16-matmul reference (same operand rounding as kernel).
    for x, p, o in zip(inputs, embedder.params, outs):
        r = mesh_graph_mlp_ref(x, p, matmul_dtype=jnp.bfloat16)
        assert o.shape == (x.shape[0], OUT_DIM), (o.shape, x.shape)
        assert jnp.allclose(o, r, atol=2e-2, rtol=2e-2), \
            float(jnp.max(jnp.abs(o - r)))

    # Exactness path: same kernel with f32 MXU operands vs pure-f32 reference.
    embedder_f32 = GraphCastEncoderEmbedderPallas(input_channels, k_params,
                                                  matmul_dtype=jnp.float32)
    outs_f32 = jax.block_until_ready(embedder_f32(*inputs))
    for x, p, o in zip(inputs, embedder_f32.params, outs_f32):
        r = mesh_graph_mlp_ref(x, p, matmul_dtype=jnp.float32)
        assert o.shape == (x.shape[0], OUT_DIM), (o.shape, x.shape)
        assert jnp.allclose(o, r, atol=1e-4, rtol=1e-4), \
            float(jnp.max(jnp.abs(o - r)))

    print("KERNEL_OK")
</pallas_src>

<mosaic_0001>
module attributes {stable_mosaic.version = 11 : i64} {
  func.func @_fused_mlp_ln_kernel(%arg0: i32, %arg1: memref<4xi32, #tpu.memory_space<smem>>, %arg2: memref<32x32xbf16, #tpu.memory_space<vmem>>, %arg3: memref<1x32x128xbf16, #tpu.memory_space<vmem>>, %arg4: memref<1x1x128xf32, #tpu.memory_space<vmem>>, %arg5: memref<1x128x128xbf16, #tpu.memory_space<vmem>>, %arg6: memref<1x1x128xf32, #tpu.memory_space<vmem>>, %arg7: memref<1x1x128xf32, #tpu.memory_space<vmem>>, %arg8: memref<1x1x128xf32, #tpu.memory_space<vmem>>, %arg9: memref<128x128xbf16, #tpu.memory_space<vmem>>, %arg10: memref<32x128xf32, #tpu.memory_space<vmem>>) attributes {dimension_semantics = [#tpu.dimension_semantics<parallel>], iteration_bounds = array<i64: 4>, scalar_prefetch = 1 : i64, scratch_operands = 0 : i64, tpu.core_type = #tpu.core_type<tc>, window_params = [{transform_indices = @transform_0, window_bounds = array<i64: 32, 32>}, {transform_indices = @transform_1, window_bounds = array<i64: 1, 32, 128>}, {transform_indices = @transform_2, window_bounds = array<i64: 1, 1, 128>}, {transform_indices = @transform_3, window_bounds = array<i64: 1, 128, 128>}, {transform_indices = @transform_4, window_bounds = array<i64: 1, 1, 128>}, {transform_indices = @transform_5, window_bounds = array<i64: 1, 1, 128>}, {transform_indices = @transform_6, window_bounds = array<i64: 1, 1, 128>}, {pipeline_mode = #tpu.pipeline_mode<synchronous>, transform_indices = @transform_7, window_bounds = array<i64: 128, 128>}, {transform_indices = @transform_8, window_bounds = array<i64: 32, 128>}]} {
    %c0 = arith.constant 0 : index
    %c0_0 = arith.constant 0 : index
    %0 = vector.load %arg2[%c0, %c0_0] : memref<32x32xbf16, #tpu.memory_space<vmem>>, vector<32x32xbf16>
    %c0_1 = arith.constant 0 : index
    %c0_2 = arith.constant 0 : index
    %c0_3 = arith.constant 0 : index
    %1 = vector.load %arg3[%c0_1, %c0_2, %c0_3] : memref<1x32x128xbf16, #tpu.memory_space<vmem>>, vector<1x32x128xbf16>
    %2 = vector.shape_cast %1 : vector<1x32x128xbf16> to vector<32x128xbf16>
    %cst = arith.constant dense<0.000000e+00> : vector<32x128xf32>
    %3 = tpu.matmul %0, %2, %cst {dimension_numbers = #tpu.dot_dimension_numbers<[1], [0], [0], [1], [0, 0, 1, 1], [], []>} : vector<32x32xbf16>, vector<32x128xbf16>, vector<32x128xf32> -> vector<32x128xf32>
    %c0_4 = arith.constant 0 : index
    %c0_5 = arith.constant 0 : index
    %c0_6 = arith.constant 0 : index
    %4 = vector.load %arg4[%c0_4, %c0_5, %c0_6] : memref<1x1x128xf32, #tpu.memory_space<vmem>>, vector<1x1x128xf32>
    %5 = vector.shape_cast %4 : vector<1x1x128xf32> to vector<1x128xf32>
    %6 = vector.broadcast %5 : vector<1x128xf32> to vector<32x128xf32>
    %7 = arith.addf %3, %6 : vector<32x128xf32>
    %8 = arith.negf %7 : vector<32x128xf32>
    %9 = math.exp %8 : vector<32x128xf32>
    %cst_7 = arith.constant 1.000000e+00 : f32
    %10 = vector.broadcast %cst_7 : f32 to vector<32x128xf32>
    %11 = arith.addf %10, %9 : vector<32x128xf32>
    %12 = arith.divf %10, %11 : vector<32x128xf32>
    %13 = arith.mulf %7, %12 : vector<32x128xf32>
    %14 = arith.truncf %13 : vector<32x128xf32> to vector<32x128xbf16>
    %c0_8 = arith.constant 0 : index
    %c0_9 = arith.constant 0 : index
    %c0_10 = arith.constant 0 : index
    %15 = vector.load %arg5[%c0_8, %c0_9, %c0_10] : memref<1x128x128xbf16, #tpu.memory_space<vmem>>, vector<1x128x128xbf16>
    %16 = vector.shape_cast %15 : vector<1x128x128xbf16> to vector<128x128xbf16>
    %cst_11 = arith.constant dense<0.000000e+00> : vector<32x128xf32>
    %17 = tpu.matmul %14, %16, %cst_11 {dimension_numbers = #tpu.dot_dimension_numbers<[1], [0], [0], [1], [0, 0, 1, 1], [], []>} : vector<32x128xbf16>, vector<128x128xbf16>, vector<32x128xf32> -> vector<32x128xf32>
    %c0_12 = arith.constant 0 : index
    %c0_13 = arith.constant 0 : index
    %c0_14 = arith.constant 0 : index
    %18 = vector.load %arg6[%c0_12, %c0_13, %c0_14] : memref<1x1x128xf32, #tpu.memory_space<vmem>>, vector<1x1x128xf32>
    %19 = vector.shape_cast %18 : vector<1x1x128xf32> to vector<1x128xf32>
    %20 = vector.broadcast %19 : vector<1x128xf32> to vector<32x128xf32>
    %21 = arith.addf %17, %20 : vector<32x128xf32>
    %22 = arith.truncf %21 : vector<32x128xf32> to vector<32x128xbf16>
    %23 = arith.mulf %21, %21 : vector<32x128xf32>
    %24 = arith.truncf %23 : vector<32x128xf32> to vector<32x128xbf16>
    %c0_15 = arith.constant 0 : index
    %c0_16 = arith.constant 0 : index
    %25 = vector.load %arg9[%c0_15, %c0_16] : memref<128x128xbf16, #tpu.memory_space<vmem>>, vector<128x128xbf16>
    %cst_17 = arith.constant dense<0.000000e+00> : vector<32x128xf32>
    %26 = tpu.matmul %22, %25, %cst_17 {dimension_numbers = #tpu.dot_dimension_numbers<[1], [0], [0], [1], [0, 0, 1, 1], [], []>} : vector<32x128xbf16>, vector<128x128xbf16>, vector<32x128xf32> -> vector<32x128xf32>
    %c0_18 = arith.constant 0 : index
    %c0_19 = arith.constant 0 : index
    %27 = vector.load %arg9[%c0_18, %c0_19] : memref<128x128xbf16, #tpu.memory_space<vmem>>, vector<128x128xbf16>
    %cst_20 = arith.constant dense<0.000000e+00> : vector<32x128xf32>
    %28 = tpu.matmul %24, %27, %cst_20 {dimension_numbers = #tpu.dot_dimension_numbers<[1], [0], [0], [1], [0, 0, 1, 1], [], []>} : vector<32x128xbf16>, vector<128x128xbf16>, vector<32x128xf32> -> vector<32x128xf32>
    %29 = arith.mulf %26, %26 : vector<32x128xf32>
    %30 = arith.subf %28, %29 : vector<32x128xf32>
    %cst_21 = arith.constant 0.000000e+00 : f32
    %31 = vector.broadcast %cst_21 : f32 to vector<32x128xf32>
    %32 = arith.maximumf %30, %31 : vector<32x128xf32>
    %33 = arith.subf %21, %26 : vector<32x128xf32>
    %cst_22 = arith.constant 9.99999974E-6 : f32
    %34 = vector.broadcast %cst_22 : f32 to vector<32x128xf32>
    %35 = arith.addf %32, %34 : vector<32x128xf32>
    %36 = math.rsqrt %35 : vector<32x128xf32>
    %37 = arith.mulf %33, %36 : vector<32x128xf32>
    %c0_23 = arith.constant 0 : index
    %c0_24 = arith.constant 0 : index
    %c0_25 = arith.constant 0 : index
    %38 = vector.load %arg7[%c0_23, %c0_24, %c0_25] : memref<1x1x128xf32, #tpu.memory_space<vmem>>, vector<1x1x128xf32>
    %39 = vector.shape_cast %38 : vector<1x1x128xf32> to vector<1x128xf32>
    %40 = vector.broadcast %39 : vector<1x128xf32> to vector<32x128xf32>
    %41 = arith.mulf %37, %40 : vector<32x128xf32>
    %c0_26 = arith.constant 0 : index
    %c0_27 = arith.constant 0 : index
    %c0_28 = arith.constant 0 : index
    %42 = vector.load %arg8[%c0_26, %c0_27, %c0_28] : memref<1x1x128xf32, #tpu.memory_space<vmem>>, vector<1x1x128xf32>
    %43 = vector.shape_cast %42 : vector<1x1x128xf32> to vector<1x128xf32>
    %44 = vector.broadcast %43 : vector<1x128xf32> to vector<32x128xf32>
    %45 = arith.addf %41, %44 : vector<32x128xf32>
    %c0_29 = arith.constant 0 : index
    %c0_30 = arith.constant 0 : index
    %46 = vector.load %arg10[%c0_29, %c0_30] : memref<32x128xf32, #tpu.memory_space<vmem>>, vector<32x128xf32>
    tpu.vector_store %arg10[%c0_29, %c0_30], %45 {strides = array<i32>} : memref<32x128xf32, #tpu.memory_space<vmem>>, vector<32x128xf32>,
    return
  }
  func.func @transform_0(%arg0: i32, %arg1: memref<4xi32, #tpu.memory_space<smem>>) -> (i32, i32) {
    %c0_i32 = arith.constant 0 : i32
    %c0_i32_0 = arith.constant 0 : i32
    return %arg0, %c0_i32 : i32, i32
  }
  func.func @transform_1(%arg0: i32, %arg1: memref<4xi32, #tpu.memory_space<smem>>) -> (i32, i32, i32) {
    %0 = arith.index_cast %arg0 : i32 to index
    %1 = memref.load %arg1[%0] : memref<4xi32, #tpu.memory_space<smem>>
    %c0_i32 = arith.constant 0 : i32
    %c0_i32_0 = arith.constant 0 : i32
    %c0_i32_1 = arith.constant 0 : i32
    return %1, %c0_i32, %c0_i32_0 : i32, i32, i32
  }
  func.func @transform_2(%arg0: i32, %arg1: memref<4xi32, #tpu.memory_space<smem>>) -> (i32, i32, i32) {
    %0 = arith.index_cast %arg0 : i32 to index
    %1 = memref.load %arg1[%0] : memref<4xi32, #tpu.memory_space<smem>>
    %c0_i32 = arith.constant 0 : i32
    %c0_i32_0 = arith.constant 0 : i32
    %c0_i32_1 = arith.constant 0 : i32
    return %1, %c0_i32, %c0_i32_0 : i32, i32, i32
  }
  func.func @transform_3(%arg0: i32, %arg1: memref<4xi32, #tpu.memory_space<smem>>) -> (i32, i32, i32) {
    %0 = arith.index_cast %arg0 : i32 to index
    %1 = memref.load %arg1[%0] : memref<4xi32, #tpu.memory_space<smem>>
    %c0_i32 = arith.constant 0 : i32
    %c0_i32_0 = arith.constant 0 : i32
    %c0_i32_1 = arith.constant 0 : i32
    return %1, %c0_i32, %c0_i32_0 : i32, i32, i32
  }
  func.func @transform_4(%arg0: i32, %arg1: memref<4xi32, #tpu.memory_space<smem>>) -> (i32, i32, i32) {
    %0 = arith.index_cast %arg0 : i32 to index
    %1 = memref.load %arg1[%0] : memref<4xi32, #tpu.memory_space<smem>>
    %c0_i32 = arith.constant 0 : i32
    %c0_i32_0 = arith.constant 0 : i32
    %c0_i32_1 = arith.constant 0 : i32
    return %1, %c0_i32, %c0_i32_0 : i32, i32, i32
  }
  func.func @transform_5(%arg0: i32, %arg1: memref<4xi32, #tpu.memory_space<smem>>) -> (i32, i32, i32) {
    %0 = arith.index_cast %arg0 : i32 to index
    %1 = memref.load %arg1[%0] : memref<4xi32, #tpu.memory_space<smem>>
    %c0_i32 = arith.constant 0 : i32
    %c0_i32_0 = arith.constant 0 : i32
    %c0_i32_1 = arith.constant 0 : i32
    return %1, %c0_i32, %c0_i32_0 : i32, i32, i32
  }
  func.func @transform_6(%arg0: i32, %arg1: memref<4xi32, #tpu.memory_space<smem>>) -> (i32, i32, i32) {
    %0 = arith.index_cast %arg0 : i32 to index
    %1 = memref.load %arg1[%0] : memref<4xi32, #tpu.memory_space<smem>>
    %c0_i32 = arith.constant 0 : i32
    %c0_i32_0 = arith.constant 0 : i32
    %c0_i32_1 = arith.constant 0 : i32
    return %1, %c0_i32, %c0_i32_0 : i32, i32, i32
  }
  func.func @transform_7(%arg0: i32, %arg1: memref<4xi32, #tpu.memory_space<smem>>) -> (i32, i32) {
    %c0_i32 = arith.constant 0 : i32
    %c0_i32_0 = arith.constant 0 : i32
    %c0_i32_1 = arith.constant 0 : i32
    return %c0_i32, %c0_i32_0 : i32, i32
  }
  func.func @transform_8(%arg0: i32, %arg1: memref<4xi32, #tpu.memory_space<smem>>) -> (i32, i32) {
    %c0_i32 = arith.constant 0 : i32
    %c0_i32_0 = arith.constant 0 : i32
    return %arg0, %c0_i32 : i32, i32
  }
}

</mosaic_0001>

<llo_original>
// kernel: a_call__.1
$region0: #{a_call__.1}
  #allocation0 [shape = 'u32[]', space=smem, size = 0x4, offset = 0x4, fixed_abs, tag = 'smem constant byte address 0x4 - core index']
  #allocation1 [shape = 'u32[72,128]{1,0:T(1,128)}', space=vmem, size = 0x9000, scoped, tag = 'internal scratch']
  #allocation2 [shape = 's32[1]{0}', space=sflag, size = 0x4, scoped, tag = 'scoped memory for a_call__.1']
  #allocation3 [shape = 'u8[512]{0}', space=smem, size = 0x200, scoped, tag = 'prefetched SMEM operand 0']
  %s0 = inlined_call_operand.vmem [shape: s32[4], index: 0, kind: input, shape index: {}]
  %s1 = inlined_call_operand.vmem [shape: bf16[128,32], index: 1, kind: input, shape index: {}]
  %s2 = inlined_call_operand.vmem [shape: bf16[4,32,128], index: 2, kind: input, shape index: {}]
  %s3 = inlined_call_operand.vmem [shape: f32[4,1,128], index: 3, kind: input, shape index: {}]
  %s4 = inlined_call_operand.vmem [shape: bf16[4,128,128], index: 4, kind: input, shape index: {}]
  %s5 = inlined_call_operand.vmem [shape: f32[4,1,128], index: 5, kind: input, shape index: {}]
  %s6 = inlined_call_operand.vmem [shape: f32[4,1,128], index: 6, kind: input, shape index: {}]
  %s7 = inlined_call_operand.vmem [shape: f32[4,1,128], index: 7, kind: input, shape index: {}]
  %s8 = inlined_call_operand.vmem [shape: bf16[128,128], index: 8, kind: input, shape index: {}]
  %s9 = inlined_call_operand.vmem [shape: f32[128,128], index: 9, kind: output, shape index: {}]
  %s10 = sld [smem:[#allocation0]]
  $region65: #{a_call__.1} parent=0
    _
  %s12 = ssub.s32 1, %s10
  %s13 = scalar_select 0, %s12, %s10
  %s15 = sshll.u32 %s0, 4
  %s16 = int_to_ptr.vmem [resolvable:$true] %s15
  %18 = dma.vmem_to_smem %s16, 16, [#allocation3], [#allocation2]
  %20 = dma.done [#allocation2], 16
  %21 = sfence
  loop: start=0, step=1, limit=6
  $region2: #{a_call__.1} parent=0 // loop_pre_header
    _
  $region3: #{a_call__.1} parent=0 // loop_header
    %s23 = sphi 0, %s27
    %p24 = scmp.ge.s32.totalorder %s23, 6
    %s33 = sphi 0, %s35
    %s36 = sphi 0, %s33
    %s37 = sphi 0, %s36
    %s53 = sphi 0, %s37
    %s61 = sphi 0, %s63
    %s64 = sphi 0, %s61
    %s65 = sphi 0, %s64
    %s81 = sphi 0, %s65
    %s89 = sphi 0, %s91
    %s92 = sphi 0, %s89
    %s93 = sphi 0, %s92
    %s109 = sphi 0, %s93
    %s117 = sphi 0, %s119
    %s120 = sphi 0, %s117
    %s121 = sphi 0, %s120
    %s137 = sphi 0, %s121
    %s145 = sphi 0, %s147
    %s148 = sphi 0, %s145
    %s149 = sphi 0, %s148
    %s165 = sphi 0, %s149
    %s173 = sphi 0, %s175
    %s176 = sphi 0, %s173
    %s177 = sphi 0, %s176
    %s193 = sphi 0, %s177
    %s201 = sphi 0, %s203
    %s204 = sphi 0, %s201
    %s205 = sphi 0, %s204
    %s221 = sphi 0, %s205
    %s225 = sphi 0, %s225
    %s227 = sphi 0, %s225
    %s228 = sphi 0, %s227
    %s242 = sphi 0, %s228
    %s248 = sphi 0, %s250
    %s251 = sphi 0, %s248
    %s252 = sphi 0, %s251
    %s268 = sphi 0, %s252
  $region4: #{a_call__.1} parent=0 // loop_header_branch
    %26 = sbr.rel (%p24) target = $region8
  $region5: #{a_call__.1} parent=0 // loop_body
    %s28 = ssub.s32 %s23, 1
    %s29 = ssub.s32 %s23, 2
    %s30 = sadd.s32 %s23, 1
    %s31 = ssub.s32 %s23, %s30
    %p32 = scmp.eq.s32.totalorder %s31, 0
    %s34 = sadd.s32 %s33, 1
    %s35 = scalar_select %p32, %s33, %s34
    %p38 = pneg %p32
    %p39 = scmp.eq.s32.totalorder %s23, 3
    %p40 = por %p38, %p39
    %p41 = scmp.ne.s32.totalorder %s33, %s36
    %p42 = scmp.eq.s32.totalorder %s23, 0
    %p43 = por %p41, %p42
    %p44 = scmp.ne.s32.totalorder %s33, %s36
    %p45 = scmp.eq.s32.totalorder %s28, 3
    %p46 = por %p44, %p45
    %p47 = scmp.ne.s32.totalorder %s36, %s37
    %p48 = scmp.eq.s32.totalorder %s28, 0
    %p49 = por %p47, %p48
    %p50 = scmp.ne.s32.totalorder %s36, %s37
    %p51 = scmp.eq.s32.totalorder %s29, 3
    %p52 = por %p50, %p51
    %p54 = scmp.ne.s32.totalorder %s37, %s53
    %p55 = scmp.eq.s32.totalorder %s29, 0
    %p56 = por %p54, %p55
    %s57 = sld [smem:[#allocation3 + %s23]]
    %s58 = sld [smem:[#allocation3 + %s30]]
    %s59 = ssub.s32 %s57, %s58
    %p60 = scmp.eq.s32.totalorder %s59, 0
    %s62 = sadd.s32 %s61, 1
    %s63 = scalar_select %p60, %s61, %s62
    %p66 = pneg %p60
    %p67 = scmp.eq.s32.totalorder %s23, 3
    %p68 = por %p66, %p67
    %p69 = scmp.ne.s32.totalorder %s61, %s64
    %p70 = scmp.eq.s32.totalorder %s23, 0
    %p71 = por %p69, %p70
    %p72 = scmp.ne.s32.totalorder %s61, %s64
    %p73 = scmp.eq.s32.totalorder %s28, 3
    %p74 = por %p72, %p73
    %p75 = scmp.ne.s32.totalorder %s64, %s65
    %p76 = scmp.eq.s32.totalorder %s28, 0
    %p77 = por %p75, %p76
    %p78 = scmp.ne.s32.totalorder %s64, %s65
    %p79 = scmp.eq.s32.totalorder %s29, 3
    %p80 = por %p78, %p79
    %p82 = scmp.ne.s32.totalorder %s65, %s81
    %p83 = scmp.eq.s32.totalorder %s29, 0
    %p84 = por %p82, %p83
    %s85 = sld [smem:[#allocation3 + %s23]]
    %s86 = sld [smem:[#allocation3 + %s30]]
    %s87 = ssub.s32 %s85, %s86
    %p88 = scmp.eq.s32.totalorder %s87, 0
    %s90 = sadd.s32 %s89, 1
    %s91 = scalar_select %p88, %s89, %s90
    %p94 = pneg %p88
    %p95 = scmp.eq.s32.totalorder %s23, 3
    %p96 = por %p94, %p95
    %p97 = scmp.ne.s32.totalorder %s89, %s92
    %p98 = scmp.eq.s32.totalorder %s23, 0
    %p99 = por %p97, %p98
    %p100 = scmp.ne.s32.totalorder %s89, %s92
    %p101 = scmp.eq.s32.totalorder %s28, 3
    %p102 = por %p100, %p101
    %p103 = scmp.ne.s32.totalorder %s92, %s93
    %p104 = scmp.eq.s32.totalorder %s28, 0
    %p105 = por %p103, %p104
    %p106 = scmp.ne.s32.totalorder %s92, %s93
    %p107 = scmp.eq.s32.totalorder %s29, 3
    %p108 = por %p106, %p107
    %p110 = scmp.ne.s32.totalorder %s93, %s109
    %p111 = scmp.eq.s32.totalorder %s29, 0
    %p112 = por %p110, %p111
    %s113 = sld [smem:[#allocation3 + %s23]]
    %s114 = sld [smem:[#allocation3 + %s30]]
    %s115 = ssub.s32 %s113, %s114
    %p116 = scmp.eq.s32.totalorder %s115, 0
    %s118 = sadd.s32 %s117, 1
    %s119 = scalar_select %p116, %s117, %s118
    %p122 = pneg %p116
    %p123 = scmp.eq.s32.totalorder %s23, 3
    %p124 = por %p122, %p123
    %p125 = scmp.ne.s32.totalorder %s117, %s120
    %p126 = scmp.eq.s32.totalorder %s23, 0
    %p127 = por %p125, %p126
    %p128 = scmp.ne.s32.totalorder %s117, %s120
    %p129 = scmp.eq.s32.totalorder %s28, 3
    %p130 = por %p128, %p129
    %p131 = scmp.ne.s32.totalorder %s120, %s121
    %p132 = scmp.eq.s32.totalorder %s28, 0
    %p133 = por %p131, %p132
    %p134 = scmp.ne.s32.totalorder %s120, %s121
    %p135 = scmp.eq.s32.totalorder %s29, 3
    %p136 = por %p134, %p135
    %p138 = scmp.ne.s32.totalorder %s121, %s137
    %p139 = scmp.eq.s32.totalorder %s29, 0
    %p140 = por %p138, %p139
    %s141 = sld [smem:[#allocation3 + %s23]]
    %s142 = sld [smem:[#allocation3 + %s30]]
    %s143 = ssub.s32 %s141, %s142
    %p144 = scmp.eq.s32.totalorder %s143, 0
    %s146 = sadd.s32 %s145, 1
    %s147 = scalar_select %p144, %s145, %s146
    %p150 = pneg %p144
    %p151 = scmp.eq.s32.totalorder %s23, 3
    %p152 = por %p150, %p151
    %p153 = scmp.ne.s32.totalorder %s145, %s148
    %p154 = scmp.eq.s32.totalorder %s23, 0
    %p155 = por %p153, %p154
    %p156 = scmp.ne.s32.totalorder %s145, %s148
    %p157 = scmp.eq.s32.totalorder %s28, 3
    %p158 = por %p156, %p157
    %p159 = scmp.ne.s32.totalorder %s148, %s149
    %p160 = scmp.eq.s32.totalorder %s28, 0
    %p161 = por %p159, %p160
    %p162 = scmp.ne.s32.totalorder %s148, %s149
    %p163 = scmp.eq.s32.totalorder %s29, 3
    %p164 = por %p162, %p163
    %p166 = scmp.ne.s32.totalorder %s149, %s165
    %p167 = scmp.eq.s32.totalorder %s29, 0
    %p168 = por %p166, %p167
    %s169 = sld [smem:[#allocation3 + %s23]]
    %s170 = sld [smem:[#allocation3 + %s30]]
    %s171 = ssub.s32 %s169, %s170
    %p172 = scmp.eq.s32.totalorder %s171, 0
    %s174 = sadd.s32 %s173, 1
    %s175 = scalar_select %p172, %s173, %s174
    %p178 = pneg %p172
    %p179 = scmp.eq.s32.totalorder %s23, 3
    %p180 = por %p178, %p179
    %p181 = scmp.ne.s32.totalorder %s173, %s176
    %p182 = scmp.eq.s32.totalorder %s23, 0
    %p183 = por %p181, %p182
    %p184 = scmp.ne.s32.totalorder %s173, %s176
    %p185 = scmp.eq.s32.totalorder %s28, 3
    %p186 = por %p184, %p185
    %p187 = scmp.ne.s32.totalorder %s176, %s177
    %p188 = scmp.eq.s32.totalorder %s28, 0
    %p189 = por %p187, %p188
    %p190 = scmp.ne.s32.totalorder %s176, %s177
    %p191 = scmp.eq.s32.totalorder %s29, 3
    %p192 = por %p190, %p191
    %p194 = scmp.ne.s32.totalorder %s177, %s193
    %p195 = scmp.eq.s32.totalorder %s29, 0
    %p196 = por %p194, %p195
    %s197 = sld [smem:[#allocation3 + %s23]]
    %s198 = sld [smem:[#allocation3 + %s30]]
    %s199 = ssub.s32 %s197, %s198
    %p200 = scmp.eq.s32.totalorder %s199, 0
    %s202 = sadd.s32 %s201, 1
    %s203 = scalar_select %p200, %s201, %s202
    %p206 = pneg %p200
    %p207 = scmp.eq.s32.totalorder %s23, 3
    %p208 = por %p206, %p207
    %p209 = scmp.ne.s32.totalorder %s201, %s204
    %p210 = scmp.eq.s32.totalorder %s23, 0
    %p211 = por %p209, %p210
    %p212 = scmp.ne.s32.totalorder %s201, %s204
    %p213 = scmp.eq.s32.totalorder %s28, 3
    %p214 = por %p212, %p213
    %p215 = scmp.ne.s32.totalorder %s204, %s205
    %p216 = scmp.eq.s32.totalorder %s28, 0
    %p217 = por %p215, %p216
    %p218 = scmp.ne.s32.totalorder %s204, %s205
    %p219 = scmp.eq.s32.totalorder %s29, 3
    %p220 = por %p218, %p219
    %p222 = scmp.ne.s32.totalorder %s205, %s221
    %p223 = scmp.eq.s32.totalorder %s29, 0
    %p224 = por %p222, %p223
    %s226 = sadd.s32 %s225, 1
    %p229 = scmp.eq.s32.totalorder %s23, 3
    %p230 = scmp.ne.s32.totalorder %s225, %s227
    %p231 = scmp.eq.s32.totalorder %s23, 0
    %p232 = por %p230, %p231
    %p233 = scmp.ne.s32.totalorder %s225, %s227
    %p234 = scmp.eq.s32.totalorder %s28, 3
    %p235 = por %p233, %p234
    %p236 = scmp.ne.s32.totalorder %s227, %s228
    %p237 = scmp.eq.s32.totalorder %s28, 0
    %p238 = por %p236, %p237
    %p239 = scmp.ne.s32.totalorder %s227, %s228
    %p240 = scmp.eq.s32.totalorder %s29, 3
    %p241 = por %p239, %p240
    %p243 = scmp.ne.s32.totalorder %s228, %s242
    %p244 = scmp.eq.s32.totalorder %s29, 0
    %p245 = por %p243, %p244
    %s246 = ssub.s32 %s23, %s30
    %p247 = scmp.eq.s32.totalorder %s246, 0
    %s249 = sadd.s32 %s248, 1
    %s250 = scalar_select %p247, %s248, %s249
    %p253 = pneg %p247
    %p254 = scmp.eq.s32.totalorder %s23, 3
    %p255 = por %p253, %p254
    %p256 = scmp.ne.s32.totalorder %s248, %s251
    %p257 = scmp.eq.s32.totalorder %s23, 0
    %p258 = por %p256, %p257
    %p259 = scmp.ne.s32.totalorder %s248, %s251
    %p260 = scmp.eq.s32.totalorder %s28, 3
    %p261 = por %p259, %p260
    %p262 = scmp.ne.s32.totalorder %s251, %s252
    %p263 = scmp.eq.s32.totalorder %s28, 0
    %p264 = por %p262, %p263
    %p265 = scmp.ne.s32.totalorder %s251, %s252
    %p266 = scmp.eq.s32.totalorder %s29, 3
    %p267 = por %p265, %p266
    %p269 = scmp.ne.s32.totalorder %s252, %s268
    %p270 = scmp.eq.s32.totalorder %s29, 0
    %p271 = por %p269, %p270
    %p272 = scmp.le.s32.totalorder 1, %s23
    %p273 = scmp.lt.s32.totalorder %s23, 5
    %p274 = pnand %p272, %p273
    %p275 = pneg %p274
    // Predicated region
    $region9: #{a_call__.1} parent=5 // pred_check
      _
    $region10: #{a_call__.1} parent=5 // pred_check_branch
      %277 = sbr.rel (%p274) target = $region12
    $region11: #{a_call__.1} parent=5 // pred_region
      %s278 = ssub.s32 %s23, 1
      // Predicated region
      $region13: #{a_call__.1} parent=11 // pred_check
        %p279 = pneg %p238
      $region14: #{a_call__.1} parent=11 // pred_check_branch
        %281 = sbr.rel (%p279) target = $region16
      $region15: #{a_call__.1} parent=11 // pred_region
        _
      $region16: #{a_call__.1} parent=11 // pred_fallthru
        _
    $region12: #{a_call__.1} parent=5 // pred_fallthru
      _
    %p282 = scmp.lt.s32.totalorder %s23, 4
    // Predicated region
    $region17: #{a_call__.1} parent=5 // pred_check
      %p283 = pneg %p282
    $region18: #{a_call__.1} parent=5 // pred_check_branch
      %285 = sbr.rel (%p283) target = $region20
    $region19: #{a_call__.1} parent=5 // pred_region
      // Predicated region
      $region21: #{a_call__.1} parent=19 // pred_check
        %p286 = pneg %p43
      $region22: #{a_call__.1} parent=19 // pred_check_branch
        %288 = sbr.rel (%p286) target = $region24
      $region23: #{a_call__.1} parent=19 // pred_region
        %s289 = smul.u32 4, %s23
        %p290 = scmp.lt.s32.totalorder %s289, 15
        %s291 = scalar_select %p290, %s289, 15
        %s292 = smul.addr %s291, 4
        %s293 = scalar_lea.vmem %s1, %s292
        %s294 = smul.u32 4, %s23
      $region24: #{a_call__.1} parent=19 // pred_fallthru
        _
      // Predicated region
      $region25: #{a_call__.1} parent=19 // pred_check
        %p295 = pneg %p71
      $region26: #{a_call__.1} parent=19 // pred_check_branch
        %297 = sbr.rel (%p295) target = $region28
      $region27: #{a_call__.1} parent=19 // pred_region
        %s298 = sld [smem:[#allocation3 + %s23]]
        %p299 = scmp.lt.s32.totalorder %s298, 3
        %s300 = scalar_select %p299, %s298, 3
        %s301 = smul.addr %s300, 4
        %s302 = smul.addr %s301, 4
        %s303 = scalar_lea.vmem %s2, %s302
        %s304 = sld [smem:[#allocation3 + %s23]]
      $region28: #{a_call__.1} parent=19 // pred_fallthru
        _
      // Predicated region
      $region29: #{a_call__.1} parent=19 // pred_check
        %p305 = pneg %p99
      $region30: #{a_call__.1} parent=19 // pred_check_branch
        %307 = sbr.rel (%p305) target = $region32
      $region31: #{a_call__.1} parent=19 // pred_region
        %s308 = sld [smem:[#allocation3 + %s23]]
        %p309 = scmp.lt.s32.totalorder %s308, 3
        %s310 = scalar_select %p309, %s308, 3
        %s311 = scalar_lea.vmem %s3, %s310
        %s312 = sld [smem:[#allocation3 + %s23]]
      $region32: #{a_call__.1} parent=19 // pred_fallthru
        _
      // Predicated region
      $region33: #{a_call__.1} parent=19 // pred_check
        %p313 = pneg %p127
      $region34: #{a_call__.1} parent=19 // pred_check_branch
        %315 = sbr.rel (%p313) target = $region36
      $region35: #{a_call__.1} parent=19 // pred_region
        %s316 = sld [smem:[#allocation3 + %s23]]
        %p317 = scmp.lt.s32.totalorder %s316, 3
        %s318 = scalar_select %p317, %s316, 3
        %s319 = smul.addr %s318, 16
        %s320 = smul.addr %s319, 4
        %s321 = scalar_lea.vmem %s4, %s320
        %s322 = sld [smem:[#allocation3 + %s23]]
      $region36: #{a_call__.1} parent=19 // pred_fallthru
        _
      // Predicated region
      $region37: #{a_call__.1} parent=19 // pred_check
        %p323 = pneg %p155
      $region38: #{a_call__.1} parent=19 // pred_check_branch
        %325 = sbr.rel (%p323) target = $region40
      $region39: #{a_call__.1} parent=19 // pred_region
        %s326 = sld [smem:[#allocation3 + %s23]]
        %p327 = scmp.lt.s32.totalorder %s326, 3
        %s328 = scalar_select %p327, %s326, 3
        %s329 = scalar_lea.vmem %s5, %s328
        %s330 = sld [smem:[#allocation3 + %s23]]
      $region40: #{a_call__.1} parent=19 // pred_fallthru
        _
      // Predicated region
      $region41: #{a_call__.1} parent=19 // pred_check
        %p331 = pneg %p183
      $region42: #{a_call__.1} parent=19 // pred_check_branch
        %333 = sbr.rel (%p331) target = $region44
      $region43: #{a_call__.1} parent=19 // pred_region
        %s334 = sld [smem:[#allocation3 + %s23]]
        %p335 = scmp.lt.s32.totalorder %s334, 3
        %s336 = scalar_select %p335, %s334, 3
        %s337 = scalar_lea.vmem %s6, %s336
        %s338 = sld [smem:[#allocation3 + %s23]]
      $region44: #{a_call__.1} parent=19 // pred_fallthru
        _
      // Predicated region
      $region45: #{a_call__.1} parent=19 // pred_check
        %p339 = pneg %p211
      $region46: #{a_call__.1} parent=19 // pred_check_branch
        %341 = sbr.rel (%p339) target = $region48
      $region47: #{a_call__.1} parent=19 // pred_region
        %s342 = sld [smem:[#allocation3 + %s23]]
        %p343 = scmp.lt.s32.totalorder %s342, 3
        %s344 = scalar_select %p343, %s342, 3
        %s345 = scalar_lea.vmem %s7, %s344
        %s346 = sld [smem:[#allocation3 + %s23]]
      $region48: #{a_call__.1} parent=19 // pred_fallthru
        _
    $region20: #{a_call__.1} parent=5 // pred_fallthru
      _
    %p347 = scmp.le.s32.totalorder 1, %s23
    %p348 = scmp.lt.s32.totalorder %s23, 5
    %p349 = pnand %p347, %p348
    %p350 = pneg %p349
    // Predicated region
    $region49: #{a_call__.1} parent=5 // pred_check
      _
    $region50: #{a_call__.1} parent=5 // pred_check_branch
      %352 = sbr.rel (%p349) target = $region52
    $region51: #{a_call__.1} parent=5 // pred_region
      %s353 = ssub.s32 %s23, 1
      %s354 = smul.u32 4, %s28
      %p355 = scmp.lt.s32.totalorder %s354, 15
      %s356 = scalar_select %p355, %s354, 15
      %s357 = smul.addr %s356, 4
      %s358 = scalar_lea.vmem %s1, %s357
      %p359 = pneg %p49
      %p360 = pneg %p46
      %s361 = sld [smem:[#allocation3 + %s28]]
      %p362 = scmp.lt.s32.totalorder %s361, 3
      %s363 = scalar_select %p362, %s361, 3
      %s364 = smul.addr %s363, 4
      %s365 = smul.addr %s364, 4
      %s366 = scalar_lea.vmem %s2, %s365
      %p367 = pneg %p77
      %p368 = pneg %p74
      %s369 = sld [smem:[#allocation3 + %s28]]
      %p370 = scmp.lt.s32.totalorder %s369, 3
      %s371 = scalar_select %p370, %s369, 3
      %s372 = scalar_lea.vmem %s3, %s371
      %p373 = pneg %p105
      %p374 = pneg %p102
      %s375 = sld [smem:[#allocation3 + %s28]]
      %p376 = scmp.lt.s32.totalorder %s375, 3
      %s377 = scalar_select %p376, %s375, 3
      %s378 = smul.addr %s377, 16
      %s379 = smul.addr %s378, 4
      %s380 = scalar_lea.vmem %s4, %s379
      %p381 = pneg %p133
      %p382 = pneg %p130
      %s383 = sld [smem:[#allocation3 + %s28]]
      %p384 = scmp.lt.s32.totalorder %s383, 3
      %s385 = scalar_select %p384, %s383, 3
      %s386 = scalar_lea.vmem %s5, %s385
      %p387 = pneg %p161
      %p388 = pneg %p158
      %s389 = sld [smem:[#allocation3 + %s28]]
      %p390 = scmp.lt.s32.totalorder %s389, 3
      %s391 = scalar_select %p390, %s389, 3
      %s392 = scalar_lea.vmem %s6, %s391
      %p393 = pneg %p189
      %p394 = pneg %p186
      %s395 = sld [smem:[#allocation3 + %s28]]
      %p396 = scmp.lt.s32.totalorder %s395, 3
      %s397 = scalar_select %p396, %s395, 3
      %s398 = scalar_lea.vmem %s7, %s397
      %p399 = pneg %p217
      %p400 = pneg %p214
      %p401 = pneg %p238
      %p402 = pneg %p235
      %p403 = pneg %p264
      %p404 = pneg %p261
      %s405 = smul.u32 4, %s28
      %p406 = scmp.lt.s32.totalorder %s405, 15
      %s407 = scalar_select %p406, %s405, 15
      %s408 = smul.addr %s407, 8
      %s409 = scalar_lea.vmem %s9, %s408
      %s410 = smul.u32 4, %s28
      %p411 = scmp.lt.s32.totalorder %s410, 15
      %s412 = scalar_select %p411, %s410, 15
      %s413 = smul.addr %s412, 4
      %s414 = scalar_lea.vmem %s1, %s413
      %s415 = smul.u32 4, %s28
      %s416 = sld [smem:[#allocation3 + %s28]]
      %p417 = scmp.lt.s32.totalorder %s416, 3
      %s418 = scalar_select %p417, %s416, 3
      %s419 = smul.addr %s418, 4
      %s420 = smul.addr %s419, 4
      %s421 = scalar_lea.vmem %s2, %s420
      %s422 = sld [smem:[#allocation3 + %s28]]
      %s423 = sld [smem:[#allocation3 + %s28]]
      %p424 = scmp.lt.s32.totalorder %s423, 3
      %s425 = scalar_select %p424, %s423, 3
      %s426 = scalar_lea.vmem %s3, %s425
      %s427 = sld [smem:[#allocation3 + %s28]]
      %s428 = sld [smem:[#allocation3 + %s28]]
      %p429 = scmp.lt.s32.totalorder %s428, 3
      %s430 = scalar_select %p429, %s428, 3
      %s431 = smul.addr %s430, 16
      %s432 = smul.addr %s431, 4
      %s433 = scalar_lea.vmem %s4, %s432
      %s434 = sld [smem:[#allocation3 + %s28]]
      %s435 = sld [smem:[#allocation3 + %s28]]
      %p436 = scmp.lt.s32.totalorder %s435, 3
      %s437 = scalar_select %p436, %s435, 3
      %s438 = scalar_lea.vmem %s5, %s437
      %s439 = sld [smem:[#allocation3 + %s28]]
      %s440 = sld [smem:[#allocation3 + %s28]]
      %p441 = scmp.lt.s32.totalorder %s440, 3
      %s442 = scalar_select %p441, %s440, 3
      %s443 = scalar_lea.vmem %s6, %s442
      %s444 = sld [smem:[#allocation3 + %s28]]
      %s445 = sld [smem:[#allocation3 + %s28]]
      %p446 = scmp.lt.s32.totalorder %s445, 3
      %s447 = scalar_select %p446, %s445, 3
      %s448 = scalar_lea.vmem %s7, %s447
      %s449 = sld [smem:[#allocation3 + %s28]]
      %s450 = smul.u32 4, %s28
      %p451 = scmp.lt.s32.totalorder %s450, 15
      %s452 = scalar_select %p451, %s450, 15
      %s453 = smul.addr %s452, 8
      %s454 = scalar_lea.vmem %s9, %s453
      %s455 = smul.u32 4, %s28
      %v457 = vld [vmem:[%s414] sm:$0xf]
      %v458 = vld [vmem:[%s414 + $0x4] sm:$0xf]
      %v459 = vld [vmem:[%s414 + $0x8] sm:$0xf]
      %v460 = vld [vmem:[%s414 + $0xc] sm:$0xf]
      %v461 = vld [vmem:[%s421] sm:$0xf]
      %v462 = vld [vmem:[%s421 + $0x4] sm:$0xf]
      %v463 = vld [vmem:[%s421 + $0x8] sm:$0xf]
      %v464 = vld [vmem:[%s421 + $0xc] sm:$0xf]
      %v465 = vld [vmem:[%s426] sm:$0x1]
      %v467 = vperm.slane %v465, 0
      %v473 = vunpack.c.l.b16 %v457
      %v474 = vunpack.c.l.b16 %v458
      %v475 = vunpack.c.l.b16 %v459
      %v476 = vunpack.c.l.b16 %v460
      %v477 = vpack.c.b16 %v474, %v473
      %v478 = vpack.c.b16 %v476, %v475
      %v483 = vunpack.c.l.b16 %v461
      %v484 = vunpack.c.l.b16 %v462
      %v485 = vunpack.c.l.b16 %v463
      %v486 = vunpack.c.l.b16 %v464
      %v487 = vpack.c.b16 %v484, %v483
      %v488 = vpack.c.b16 %v486, %v485
      %vm491 = vcmask 261120
      %v493 = vsel %vm491, %v477, 0
      %v496 = vsel %vm491, %v478, 0
      %498 = vmatpush.bf16.msra.mxu0 0
      %499 = vmatpush.bf16.msra.mxu0 0
      %500 = vmatpush.bf16.msra.mxu0 0
      %501 = vmatpush.bf16.msra.mxu0 0
      %502 = vmatpush.bf16.msra.mxu0 0
      %503 = vmatpush.bf16.msra.mxu0 0
      %504 = vmatpush.bf16.msra.mxu0 %v488
      %505 = vmatpush.bf16.msra.mxu0 %v487
      %506 = vmatmul.bf16.gmra.mxu0 %v493
      %v507 = vpop.f32.mrf.mxu0
      %v508 = vadd.f32 %v467, %v507
      %v509 = vpop.f32.mrf.mxu0
      %v510 = vadd.f32 %v467, %v509
      %511 = vmatmul.bf16.gmra.mxu0 %v496
      %v512 = vpop.f32.mrf.mxu0
      %v513 = vadd.f32 %v467, %v512
      %v514 = vpop.f32.mrf.mxu0
      %v515 = vadd.f32 %v467, %v514
      %516 = vdwg.mxu0
      %v517 = vxor.u32 %v508, 2147483648
      %v518 = vxor.u32 %v510, 2147483648
      %v519 = vxor.u32 %v513, 2147483648
      %v520 = vxor.u32 %v515, 2147483648
      %v521 = vmul.f32 %v517, 1.442695
      %v522 = vpow.pop %v521
      %v523 = vmul.f32 %v518, 1.442695
      %v524 = vpow.pop %v523
      %v525 = vmul.f32 %v519, 1.442695
      %v526 = vpow.pop %v525
      %v527 = vmul.f32 %v520, 1.442695
      %v528 = vpow.pop %v527
      %v529 = vadd.f32 %v522, 1.0
      %v530 = vadd.f32 %v524, 1.0
      %v531 = vadd.f32 %v526, 1.0
      %v532 = vadd.f32 %v528, 1.0
      %v533 = vrcp.pop %v529
      %v534 = vmul.f32 %v529, %v533
      %v535 = vsub.f32 1.0, %v534
      %v536 = vmul.f32 %v533, %v535
      %v537 = vadd.f32 %v533, %v536
      %vm538 = vweird.f32 %v529
      %vm539 = vweird.f32 %v533
      %vm540 = vmor %vm538, %vm539
      %v541 = vsel %vm540, %v533, %v537
      %v542 = vand.u32 2147483647, %v529
      %vm543 = vcmp.eq.f32.partialorder %v542, 8.507059e+37
      %v544 = vand.u32 %v529, 2147483648
      %v545 = vor.u32 1.1754944e-38, %v544
      %v546 = vsel %vm543, %v545, %v541
      %v547 = vmul.f32 1.0, %v546
      %v548 = vrcp.pop %v530
      %v549 = vmul.f32 %v530, %v548
      %v550 = vsub.f32 1.0, %v549
      %v551 = vmul.f32 %v548, %v550
      %v552 = vadd.f32 %v548, %v551
      %vm553 = vweird.f32 %v530
      %vm554 = vweird.f32 %v548
      %vm555 = vmor %vm553, %vm554
      %v556 = vsel %vm555, %v548, %v552
      %v557 = vand.u32 2147483647, %v530
      %vm558 = vcmp.eq.f32.partialorder %v557, 8.507059e+37
      %v559 = vand.u32 %v530, 2147483648
      %v560 = vor.u32 1.1754944e-38, %v559
      %v561 = vsel %vm558, %v560, %v556
      %v562 = vmul.f32 1.0, %v561
      %v563 = vrcp.pop %v531
      %v564 = vmul.f32 %v531, %v563
      %v565 = vsub.f32 1.0, %v564
      %v566 = vmul.f32 %v563, %v565
      %v567 = vadd.f32 %v563, %v566
      %vm568 = vweird.f32 %v531
      %vm569 = vweird.f32 %v563
      %vm570 = vmor %vm568, %vm569
      %v571 = vsel %vm570, %v563, %v567
      %v572 = vand.u32 2147483647, %v531
      %vm573 = vcmp.eq.f32.partialorder %v572, 8.507059e+37
      %v574 = vand.u32 %v531, 2147483648
      %v575 = vor.u32 1.1754944e-38, %v574
      %v576 = vsel %vm573, %v575, %v571
      %v577 = vmul.f32 1.0, %v576
      %v578 = vrcp.pop %v532
      %v579 = vmul.f32 %v532, %v578
      %v580 = vsub.f32 1.0, %v579
      %v581 = vmul.f32 %v578, %v580
      %v582 = vadd.f32 %v578, %v581
      %vm583 = vweird.f32 %v532
      %vm584 = vweird.f32 %v578
      %vm585 = vmor %vm583, %vm584
      %v586 = vsel %vm585, %v578, %v582
      %v587 = vand.u32 2147483647, %v532
      %vm588 = vcmp.eq.f32.partialorder %v587, 8.507059e+37
      %v589 = vand.u32 %v532, 2147483648
      %v590 = vor.u32 1.1754944e-38, %v589
      %v591 = vsel %vm588, %v590, %v586
      %v592 = vmul.f32 1.0, %v591
      %v593 = vmul.f32 %v508, %v547
      %v594 = vmul.f32 %v510, %v562
      %v595 = vmul.f32 %v513, %v577
      %v596 = vmul.f32 %v515, %v592
      %v597 = vpack.c.bf16 %v594, %v593
      %v598 = vpack.c.bf16 %v596, %v595
      %v599 = vld [vmem:[%s433] sm:$0xf]
      %v600 = vld [vmem:[%s433 + $0x4] sm:$0xf]
      %v601 = vld [vmem:[%s433 + $0x8] sm:$0xf]
      %v602 = vld [vmem:[%s433 + $0xc] sm:$0xf]
      %v603 = vld [vmem:[%s433 + $0x10] sm:$0xf]
      %v604 = vld [vmem:[%s433 + $0x14] sm:$0xf]
      %v605 = vld [vmem:[%s433 + $0x18] sm:$0xf]
      %v606 = vld [vmem:[%s433 + $0x1c] sm:$0xf]
      %v607 = vld [vmem:[%s433 + $0x20] sm:$0xf]
      %v608 = vld [vmem:[%s433 + $0x24] sm:$0xf]
      %v609 = vld [vmem:[%s433 + $0x28] sm:$0xf]
      %v610 = vld [vmem:[%s433 + $0x2c] sm:$0xf]
      %v611 = vld [vmem:[%s433 + $0x30] sm:$0xf]
      %v612 = vld [vmem:[%s433 + $0x34] sm:$0xf]
      %v613 = vld [vmem:[%s433 + $0x38] sm:$0xf]
      %v614 = vld [vmem:[%s433 + $0x3c] sm:$0xf]
      %v615 = vld [vmem:[%s438] sm:$0x1]
      %v617 = vperm.slane %v615, 0
      %v635 = vunpack.c.l.b16 %v599
      %v636 = vunpack.c.l.b16 %v600
      %v637 = vunpack.c.l.b16 %v601
      %v638 = vunpack.c.l.b16 %v602
      %v639 = vunpack.c.l.b16 %v603
      %v640 = vunpack.c.l.b16 %v604
      %v641 = vunpack.c.l.b16 %v605
      %v642 = vunpack.c.l.b16 %v606
      %v643 = vunpack.c.l.b16 %v607
      %v644 = vunpack.c.l.b16 %v608
      %v645 = vunpack.c.l.b16 %v609
      %v646 = vunpack.c.l.b16 %v610
      %v647 = vunpack.c.l.b16 %v611
      %v648 = vunpack.c.l.b16 %v612
      %v649 = vunpack.c.l.b16 %v613
      %v650 = vunpack.c.l.b16 %v614
      %v651 = vpack.c.b16 %v636, %v635
      %v652 = vpack.c.b16 %v638, %v637
      %v653 = vpack.c.b16 %v640, %v639
      %v654 = vpack.c.b16 %v642, %v641
      %v655 = vpack.c.b16 %v644, %v643
      %v656 = vpack.c.b16 %v646, %v645
      %v657 = vpack.c.b16 %v648, %v647
      %v658 = vpack.c.b16 %v650, %v649
      %667 = vmatpush.bf16.msra.mxu0 %v658
      %668 = vmatpush.bf16.msra.mxu0 %v657
      %669 = vmatpush.bf16.msra.mxu0 %v656
      %670 = vmatpush.bf16.msra.mxu0 %v655
      %671 = vmatpush.bf16.msra.mxu0 %v654
      %672 = vmatpush.bf16.msra.mxu0 %v653
      %673 = vmatpush.bf16.msra.mxu0 %v652
      %674 = vmatpush.bf16.msra.mxu0 %v651
      %675 = vmatmul.bf16.gmra.mxu0 %v597
      %v676 = vpop.f32.mrf.mxu0
      %v677 = vadd.f32 %v617, %v676
      %v678 = vpop.f32.mrf.mxu0
      %v679 = vadd.f32 %v617, %v678
      %680 = vmatmul.bf16.gmra.mxu0 %v598
      %v681 = vpop.f32.mrf.mxu0
      %v682 = vadd.f32 %v617, %v681
      %v683 = vpop.f32.mrf.mxu0
      %v684 = vadd.f32 %v617, %v683
      %685 = vdwg.mxu0
      %v686 = vpack.c.bf16 %v679, %v677
      %v687 = vpack.c.bf16 %v684, %v682
      %v688 = vmul.f32 %v677, %v677
      %v689 = vmul.f32 %v679, %v679
      %v690 = vmul.f32 %v682, %v682
      %v691 = vmul.f32 %v684, %v684
      %v692 = vpack.c.bf16 %v689, %v688
      %v693 = vpack.c.bf16 %v691, %v690
      %v694 = vld [vmem:[%s8] sm:$0xf]
      %v695 = vld [vmem:[%s8 + $0x4] sm:$0xf]
      %v696 = vld [vmem:[%s8 + $0x8] sm:$0xf]
      %v697 = vld [vmem:[%s8 + $0xc] sm:$0xf]
      %v698 = vld [vmem:[%s8 + $0x10] sm:$0xf]
      %v699 = vld [vmem:[%s8 + $0x14] sm:$0xf]
      %v700 = vld [vmem:[%s8 + $0x18] sm:$0xf]
      %v701 = vld [vmem:[%s8 + $0x1c] sm:$0xf]
      %v702 = vld [vmem:[%s8 + $0x20] sm:$0xf]
      %v703 = vld [vmem:[%s8 + $0x24] sm:$0xf]
      %v704 = vld [vmem:[%s8 + $0x28] sm:$0xf]
      %v705 = vld [vmem:[%s8 + $0x2c] sm:$0xf]
      %v706 = vld [vmem:[%s8 + $0x30] sm:$0xf]
      %v707 = vld [vmem:[%s8 + $0x34] sm:$0xf]
      %v708 = vld [vmem:[%s8 + $0x38] sm:$0xf]
      %v709 = vld [vmem:[%s8 + $0x3c] sm:$0xf]
      %v726 = vunpack.c.l.b16 %v694
      %v727 = vunpack.c.l.b16 %v695
      %v728 = vunpack.c.l.b16 %v696
      %v729 = vunpack.c.l.b16 %v697
      %v730 = vunpack.c.l.b16 %v698
      %v731 = vunpack.c.l.b16 %v699
      %v732 = vunpack.c.l.b16 %v700
      %v733 = vunpack.c.l.b16 %v701
      %v734 = vunpack.c.l.b16 %v702
      %v735 = vunpack.c.l.b16 %v703
      %v736 = vunpack.c.l.b16 %v704
      %v737 = vunpack.c.l.b16 %v705
      %v738 = vunpack.c.l.b16 %v706
      %v739 = vunpack.c.l.b16 %v707
      %v740 = vunpack.c.l.b16 %v708
      %v741 = vunpack.c.l.b16 %v709
      %v742 = vpack.c.b16 %v727, %v726
      %v743 = vpack.c.b16 %v729, %v728
      %v744 = vpack.c.b16 %v731, %v730
      %v745 = vpack.c.b16 %v733, %v732
      %v746 = vpack.c.b16 %v735, %v734
      %v747 = vpack.c.b16 %v737, %v736
      %v748 = vpack.c.b16 %v739, %v738
      %v749 = vpack.c.b16 %v741, %v740
      %758 = vmatpush.bf16.msra.mxu0 %v749
      %759 = vmatpush.bf16.msra.mxu0 %v748
      %760 = vmatpush.bf16.msra.mxu0 %v747
      %761 = vmatpush.bf16.msra.mxu0 %v746
      %762 = vmatpush.bf16.msra.mxu0 %v745
      %763 = vmatpush.bf16.msra.mxu0 %v744
      %764 = vmatpush.bf16.msra.mxu0 %v743
      %765 = vmatpush.bf16.msra.mxu0 %v742
      %766 = vmatmul.bf16.gmra.mxu0 %v686
      %v767 = vpop.f32.mrf.mxu0
      %v768 = vadd.f32 0.0, %v767
      %v769 = vpop.f32.mrf.mxu0
      %v770 = vadd.f32 0.0, %v769
      %771 = vmatmul.bf16.gmra.mxu0 %v687
      %v772 = vpop.f32.mrf.mxu0
      %v773 = vadd.f32 0.0, %v772
      %v774 = vpop.f32.mrf.mxu0
      %v775 = vadd.f32 0.0, %v774
      %776 = vdwg.mxu0
      %777 = vmatpush.bf16.msra.mxu0 %v749
      %778 = vmatpush.bf16.msra.mxu0 %v748
      %779 = vmatpush.bf16.msra.mxu0 %v747
      %780 = vmatpush.bf16.msra.mxu0 %v746
      %781 = vmatpush.bf16.msra.mxu0 %v745
      %782 = vmatpush.bf16.msra.mxu0 %v744
      %783 = vmatpush.bf16.msra.mxu0 %v743
      %784 = vmatpush.bf16.msra.mxu0 %v742
      %785 = vmatmul.bf16.gmra.mxu0 %v692
      %v786 = vpop.f32.mrf.mxu0
      %v787 = vadd.f32 0.0, %v786
      %v788 = vpop.f32.mrf.mxu0
      %v789 = vadd.f32 0.0, %v788
      %790 = vmatmul.bf16.gmra.mxu0 %v693
      %v791 = vpop.f32.mrf.mxu0
      %v792 = vadd.f32 0.0, %v791
      %v793 = vpop.f32.mrf.mxu0
      %v794 = vadd.f32 0.0, %v793
      %795 = vdwg.mxu0
      %v796 = vmul.f32 %v768, %v768
      %v797 = vmul.f32 %v770, %v770
      %v798 = vmul.f32 %v773, %v773
      %v799 = vmul.f32 %v775, %v775
      %v800 = vsub.f32 %v787, %v796
      %v801 = vsub.f32 %v789, %v797
      %v802 = vsub.f32 %v792, %v798
      %v803 = vsub.f32 %v794, %v799
      %v804 = vmax.f32 %v800, 0.0
      %v805 = vmax.f32 %v801, 0.0
      %v806 = vmax.f32 %v802, 0.0
      %v807 = vmax.f32 %v803, 0.0
      %v808 = vsub.f32 %v677, %v768
      %v809 = vsub.f32 %v679, %v770
      %v810 = vsub.f32 %v682, %v773
      %v811 = vsub.f32 %v684, %v775
      %v812 = vadd.f32 %v804, 1e-05
      %v813 = vadd.f32 %v805, 1e-05
      %v814 = vadd.f32 %v806, 1e-05
      %v815 = vadd.f32 %v807, 1e-05
      %v816 = vrsqrt.pop %v812
      %v817 = vmul.f32 %v816, %v812
      %v818 = vmul.f32 %v817, %v816
      %v819 = vmul.f32 0.5, %v818
      %v820 = vsub.f32 1.5, %v819
      %v821 = vmul.f32 %v816, %v820
      %vm822 = vweird.f32 %v812
      %vm823 = vweird.f32 %v816
      %vm824 = vmor %vm822, %vm823
      %v825 = vsel %vm824, %v816, %v821
      %v826 = vrsqrt.pop %v813
      %v827 = vmul.f32 %v826, %v813
      %v828 = vmul.f32 %v827, %v826
      %v829 = vmul.f32 0.5, %v828
      %v830 = vsub.f32 1.5, %v829
      %v831 = vmul.f32 %v826, %v830
      %vm832 = vweird.f32 %v813
      %vm833 = vweird.f32 %v826
      %vm834 = vmor %vm832, %vm833
      %v835 = vsel %vm834, %v826, %v831
      %v836 = vrsqrt.pop %v814
      %v837 = vmul.f32 %v836, %v814
      %v838 = vmul.f32 %v837, %v836
      %v839 = vmul.f32 0.5, %v838
      %v840 = vsub.f32 1.5, %v839
      %v841 = vmul.f32 %v836, %v840
      %vm842 = vweird.f32 %v814
      %vm843 = vweird.f32 %v836
      %vm844 = vmor %vm842, %vm843
      %v845 = vsel %vm844, %v836, %v841
      %v846 = vrsqrt.pop %v815
      %v847 = vmul.f32 %v846, %v815
      %v848 = vmul.f32 %v847, %v846
      %v849 = vmul.f32 0.5, %v848
      %v850 = vsub.f32 1.5, %v849
      %v851 = vmul.f32 %v846, %v850
      %vm852 = vweird.f32 %v815
      %vm853 = vweird.f32 %v846
      %vm854 = vmor %vm852, %vm853
      %v855 = vsel %vm854, %v846, %v851
      %v856 = vmul.f32 %v808, %v825
      %v857 = vmul.f32 %v809, %v835
      %v858 = vmul.f32 %v810, %v845
      %v859 = vmul.f32 %v811, %v855
      %v860 = vld [vmem:[%s443] sm:$0x1]
      %v862 = vperm.slane %v860, 0
      %v864 = vmul.f32 %v856, %v862
      %v865 = vmul.f32 %v857, %v862
      %v866 = vmul.f32 %v858, %v862
      %v867 = vmul.f32 %v859, %v862
      %v868 = vld [vmem:[%s448] sm:$0x1]
      %v870 = vperm.slane %v868, 0
      %v872 = vadd.f32 %v864, %v870
      %v873 = vadd.f32 %v865, %v870
      %v874 = vadd.f32 %v866, %v870
      %v875 = vadd.f32 %v867, %v870
      %876 = vst [vmem:[%s454] sm:$0xff] %v872
      %877 = vst [vmem:[%s454 + $0x8] sm:$0xff] %v873
      %878 = vst [vmem:[%s454 + $0x10] sm:$0xff] %v874
      %879 = vst [vmem:[%s454 + $0x18] sm:$0xff] %v875
      %s880 = smul.u32 4, %s28
      %p881 = scmp.lt.s32.totalorder %s880, 15
      %s882 = scalar_select %p881, %s880, 15
      %s883 = smul.addr %s882, 8
      %s884 = scalar_lea.vmem %s9, %s883
      // Predicated region
      $region53: #{a_call__.1} parent=51 // pred_check
        %p885 = pneg %p261
      $region54: #{a_call__.1} parent=51 // pred_check_branch
        %887 = sbr.rel (%p885) target = $region56
      $region55: #{a_call__.1} parent=51 // pred_region
        %s888 = smul.u32 4, %s28
      $region56: #{a_call__.1} parent=51 // pred_fallthru
        _
    $region52: #{a_call__.1} parent=5 // pred_fallthru
      _
    %p889 = scmp.le.s32.totalorder 2, %s23
    // Predicated region
    $region57: #{a_call__.1} parent=5 // pred_check
      %p890 = pneg %p889
    $region58: #{a_call__.1} parent=5 // pred_check_branch
      %892 = sbr.rel (%p890) target = $region60
    $region59: #{a_call__.1} parent=5 // pred_region
      %s893 = ssub.s32 %s23, 2
      // Predicated region
      $region61: #{a_call__.1} parent=59 // pred_check
        %p894 = pneg %p267
      $region62: #{a_call__.1} parent=59 // pred_check_branch
        %896 = sbr.rel (%p894) target = $region64
      $region63: #{a_call__.1} parent=59 // pred_region
        %s897 = smul.u32 4, %s29
        %p898 = scmp.lt.s32.totalorder %s897, 15
        %s899 = scalar_select %p898, %s897, 15
        %s900 = smul.addr %s899, 8
        %s901 = scalar_lea.vmem %s9, %s900
      $region64: #{a_call__.1} parent=59 // pred_fallthru
        _
    $region60: #{a_call__.1} parent=5 // pred_fallthru
      _
  $region6: #{a_call__.1} parent=0 // loop_footer
    %s27 = sadd.s32 1, %s23
  $region7: #{a_call__.1} parent=0 // loop_footer_branch
    %22 = sbr.rel target = $region3
  $region8: #{a_call__.1} parent=0 // loop_exit
    _

</llo_original>
